<compile_context>
chip_gen: v7x
topology: tpu7x:2x2x1
jax: 0.10.0
libtpu: 0.0.40
codegen_flags: <defaults>
</compile_context>

<pallas_src>
import jax
import jax.numpy as jnp
from jax.experimental import pallas as pl
from jax.experimental.pallas import tpu as pltpu


def _identity_kernel(x_ref, o_ref):
    # Elementwise identity: load the tile and store it unchanged.
    o_ref[...] = x_ref[...]


def _lane_dense_2d(total, last_dim):
    """Pick a 2D (M, N) view with N a large multiple of 128 when possible."""
    for lane in (4096, 2048, 1024, 512, 256, 128):
        if total % lane == 0:
            return total // lane, lane
    # Fallback: keep the original trailing dim (stores may be masked).
    return total // last_dim, last_dim


def pallas_identity_copy(x):
    """Materialized identity copy of `x` via a tiled Pallas TPU kernel."""
    if x.size == 0:
        return x

    orig_shape = x.shape

    if x.ndim == 0:
        M, N = 1, 1
        x2 = x.reshape(1, 1)
    else:
        last = orig_shape[-1] if orig_shape[-1] > 0 else 1
        M, N = _lane_dense_2d(x.size, last)
        x2 = x.reshape(M, N)

    itemsize = jnp.dtype(x.dtype).itemsize

    # Lane (minor) tile: full extent if small, else a big multiple of 128.
    tn = N if N <= 4096 else 4096

    # Sublane tile: target ~3 MiB per tile so the double-buffered in+out
    # footprint (2 arrays x 2 buffers x tile bytes) stays under ~12 MiB,
    # which fits v5e's 16 MiB default scoped VMEM with headroom.
    target_tile_bytes = 3 * 1024 * 1024
    tm_cap = max(8, (target_tile_bytes // max(1, tn * itemsize)) // 8 * 8)
    tm = M if M <= tm_cap else tm_cap

    grid = (pl.cdiv(M, tm), pl.cdiv(N, tn))

    out2 = pl.pallas_call(
        _identity_kernel,
        out_shape=jax.ShapeDtypeStruct((M, N), x.dtype),
        grid_spec=pltpu.PrefetchScalarGridSpec(
            num_scalar_prefetch=0,
            grid=grid,
            in_specs=[pl.BlockSpec((tm, tn), lambda i, j: (i, j))],
            out_specs=pl.BlockSpec((tm, tn), lambda i, j: (i, j)),
        ),
        compiler_params=pltpu.CompilerParams(
            dimension_semantics=("parallel", "parallel")
        ),
    )(x2)

    return out2.reshape(orig_shape)


def linear_activation(x):
    """TorchLinearActivation.forward: a pure identity.

    Top optimization from review: do not launch a copy kernel at all —
    return the input unchanged (unbounded win vs. an HBM->HBM copy).
    """
    return x


if __name__ == "__main__":
    key = jax.random.PRNGKey(0)
    # Small NCHW-style input consistent with a generic activation module.
    x = jax.random.normal(key, (2, 4, 16, 16), dtype=jnp.float32)

    # Production path: zero-cost identity short-circuit.
    y_fast = linear_activation(x)
    y_fast = jax.block_until_ready(y_fast)
    assert y_fast.shape == x.shape and y_fast.dtype == x.dtype
    assert bool(jnp.all(y_fast == x))

    # Pallas path: exercise the optimized copy kernel once and verify it.
    y_kernel = pallas_identity_copy(x)
    y_kernel = jax.block_until_ready(y_kernel)
    assert y_kernel.shape == x.shape and y_kernel.dtype == x.dtype
    assert bool(jnp.all(y_kernel == x))

    print("KERNEL_OK")
</pallas_src>

<mosaic_0001>
module attributes {stable_mosaic.version = 11 : i64} {
  func.func @_identity_kernel(%arg0: i32, %arg1: i32, %arg2: memref<1x2048xf32, #tpu.memory_space<vmem>>, %arg3: memref<1x2048xf32, #tpu.memory_space<vmem>>) attributes {dimension_semantics = [#tpu.dimension_semantics<parallel>, #tpu.dimension_semantics<parallel>], iteration_bounds = array<i64: 1, 1>, scalar_prefetch = 0 : i64, scratch_operands = 0 : i64, tpu.core_type = #tpu.core_type<tc>, window_params = [{transform_indices = @transform_0, window_bounds = array<i64: 1, 2048>}, {transform_indices = @transform_1, window_bounds = array<i64: 1, 2048>}]} {
    %c0 = arith.constant 0 : index
    %c0_0 = arith.constant 0 : index
    %0 = vector.load %arg2[%c0, %c0_0] : memref<1x2048xf32, #tpu.memory_space<vmem>>, vector<1x2048xf32>
    %c0_1 = arith.constant 0 : index
    %c0_2 = arith.constant 0 : index
    %1 = vector.load %arg3[%c0_1, %c0_2] : memref<1x2048xf32, #tpu.memory_space<vmem>>, vector<1x2048xf32>
    tpu.vector_store %arg3[%c0_1, %c0_2], %0 {strides = array<i32>} : memref<1x2048xf32, #tpu.memory_space<vmem>>, vector<1x2048xf32>,
    return
  }
  func.func @transform_0(%arg0: i32, %arg1: i32) -> (i32, i32) {
    %c0_i32 = arith.constant 0 : i32
    return %arg0, %arg1 : i32, i32
  }
  func.func @transform_1(%arg0: i32, %arg1: i32) -> (i32, i32) {
    %c0_i32 = arith.constant 0 : i32
    return %arg0, %arg1 : i32, i32
  }
}

</mosaic_0001>

<llo_original>
// kernel: tpu_custom_call.1
$region0: #{tpu_custom_call.1}
  #allocation0 [shape = 'u32[]', space=smem, size = 0x4, offset = 0x4, fixed_abs, tag = 'smem constant byte address 0x4 - core index']
  #allocation1 [shape = 'u32[144,128]{1,0:T(1,128)}', space=vmem, size = 0x12000, scoped, tag = 'internal scratch']
  %s0 = inlined_call_operand.hbm [shape: f32[1,2048], index: 0, kind: input, shape index: {}]
  %s1 = inlined_call_operand.hbm [shape: f32[1,2048], index: 1, kind: output, shape index: {}]
  %s2 = sld [smem:[#allocation0]]
  $region18: #{tpu_custom_call.1} parent=0
    _
  %s4 = ssub.s32 1, %s2
  %s5 = scalar_select 0, %s4, %s2
  $region1: #{tpu_custom_call.1} parent=0
    #allocation2 [shape = 'u8[8192]{0}', space=vmem, size = 0x2000, scoped, tag = 'input window, operand 0, single buffered']
    #allocation3 [shape = 's32[1]{0}', space=sflag, size = 0x4, scoped, tag = 'scoped memory for tpu_custom_call.1']
    #allocation4 [shape = 's32[1]{0}', space=sflag, size = 0x4, scoped, tag = 'scoped memory for tpu_custom_call.1']
    #allocation5 [shape = 'u8[8192]{0}', space=vmem, size = 0x2000, scoped, tag = 'output window, operand 0, single buffered']
    %6 = vsyncpa [#allocation3], 0
    %7 = vsyncpa [#allocation4], 0
    // Predicated region
    $region2: #{tpu_custom_call.1} parent=1 // pred_check
      _
    $region3: #{tpu_custom_call.1} parent=1 // pred_check_branch
      %9 = sbr.rel (0) target = $region5
    $region4: #{tpu_custom_call.1} parent=1 // pred_region
      %s11 = ssub.s32 256, 256
      %12 = vsyncadd [#allocation3], %s11
      %s14 = sshll.u32 [#allocation2], 4
      %s15 = int_to_ptr.vmem [resolvable:$true] %s14
      %17 = dma.hbm_to_vmem [thread:$0]  %s0, 256, %s15, [#allocation3]
    $region5: #{tpu_custom_call.1} parent=1 // pred_fallthru
      _
    // Predicated region
    $region6: #{tpu_custom_call.1} parent=1 // pred_check
      _
    $region7: #{tpu_custom_call.1} parent=1 // pred_check_branch
      %19 = sbr.rel (0) target = $region9
    $region8: #{tpu_custom_call.1} parent=1 // pred_region
      %20 = dma.done [#allocation3], 256
    $region9: #{tpu_custom_call.1} parent=1 // pred_fallthru
      _
    %v21 = vld [vmem:[#allocation2] sm:$0xff]
    %v22 = vld [vmem:[#allocation2 + $0x8] sm:$0xff]
    %23 = vst [vmem:[#allocation5] sm:$0xff] %v21
    %24 = vst [vmem:[#allocation5 + $0x8] sm:$0xff] %v22
    // Predicated region
    $region10: #{tpu_custom_call.1} parent=1 // pred_check
      _
    $region11: #{tpu_custom_call.1} parent=1 // pred_check_branch
      %26 = sbr.rel (0) target = $region13
    $region12: #{tpu_custom_call.1} parent=1 // pred_region
      %s28 = ssub.s32 256, 256
      %29 = vsyncadd [#allocation4], %s28
      %s31 = sshll.u32 [#allocation5], 4
      %s32 = int_to_ptr.vmem [resolvable:$true] %s31
      %34 = dma.vmem_to_hbm [thread:$0]  %s32, 256, %s1, [#allocation4]
    $region13: #{tpu_custom_call.1} parent=1 // pred_fallthru
      _
    // Predicated region
    $region14: #{tpu_custom_call.1} parent=1 // pred_check
      _
    $region15: #{tpu_custom_call.1} parent=1 // pred_check_branch
      %36 = sbr.rel (0) target = $region17
    $region16: #{tpu_custom_call.1} parent=1 // pred_region
      %37 = dma.done [#allocation4], 256
    $region17: #{tpu_custom_call.1} parent=1 // pred_fallthru
      _
    %38 = vsyncpa [#allocation3], 1
    %39 = vsyncpa [#allocation4], 1

</llo_original>
